<compile_context>
chip_gen: v7x
topology: tpu7x:2x2x1
jax: 0.10.0
libtpu: 0.0.40
codegen_flags: <defaults>
</compile_context>

<pallas_src>
import functools

import jax
import jax.numpy as jnp
from jax.experimental import pallas as pl
from jax.experimental.pallas import tpu as pltpu


def _round_up(n: int, m: int) -> int:
    return ((n + m - 1) // m) * m


def _mlp_kernel(*refs, num_hidden_layers: int, has_actions: bool):
    """refs = (states[, actions], layer-0 params..., w2, b2, ..., out_ref).

    All layers fused: MXU matmuls with f32 accumulation, f32 VPU epilogue
    (bias add + ReLU).  Activations are cast to the weight dtype only when a
    reduced-precision MXU path was requested (weights arrive pre-cast).
    """
    out_ref = refs[-1]
    if has_actions:
        s_ref, a_ref = refs[0], refs[1]
        w1s_ref, w1a_ref, b1_ref = refs[2], refs[3], refs[4]
        w_dtype = w1s_ref.dtype
        # Split first matmul replaces the wrapper-side concat (free on the MXU).
        h = jnp.dot(s_ref[...].astype(w_dtype), w1s_ref[...],
                    preferred_element_type=jnp.float32)
        h = h + jnp.dot(a_ref[...].astype(w_dtype), w1a_ref[...],
                        preferred_element_type=jnp.float32)
        rest = refs[5:-1]
    else:
        s_ref, w1_ref, b1_ref = refs[0], refs[1], refs[2]
        h = jnp.dot(s_ref[...].astype(w1_ref.dtype), w1_ref[...],
                    preferred_element_type=jnp.float32)
        rest = refs[3:-1]
    h = jnp.maximum(h + b1_ref[...], 0.0)          # biases kept f32
    for l in range(num_hidden_layers):
        w_ref = rest[2 * l]
        b_ref = rest[2 * l + 1]
        h = jnp.dot(h.astype(w_ref.dtype), w_ref[...],
                    preferred_element_type=jnp.float32)
        h = jnp.maximum(h + b_ref[...], 0.0)
    out_ref[...] = h.astype(out_ref.dtype)


def mlp_forward(states, params, actions=None, *, block_b: int = 512,
                mxu_dtype=None):
    """Pallas MLP forward.

    states : (B, state_dim) float
    params : list of (w, b) with w: (in, out), b: (out,) or (1, out);
             ReLU after every layer.  Layer 0's `in` must equal
             state_dim (+ action_dim when `actions` is given).
    actions: optional (B, action_dim) — matches MLP.forward(states, actions).
    mxu_dtype: e.g. jnp.bfloat16 to ship weights / feed the MXU in bf16
             (f32 accumulation kept).  None = pure f32, bit-compatible with
             the torch reference.
    Returns (B, hidden_sizes[-1]) f32.
    """
    states = states.astype(jnp.float32)
    B, S = states.shape
    has_actions = actions is not None
    A = int(actions.shape[1]) if has_actions else 0
    num_layers = len(params)
    out_dim = int(params[-1][0].shape[1])
    compute_dtype = jnp.float32 if mxu_dtype is None else mxu_dtype
    w_itemsize = jnp.dtype(compute_dtype).itemsize

    # ---- batch tile selection (balanced, sublane-aligned, no pad blow-up) ----
    n_tiles = pl.cdiv(B, block_b)
    TB = _round_up(pl.cdiv(B, n_tiles), 8)
    # v7x: 2 TensorCores — give the "parallel" batch axis >= 2 steps to shard
    # across when there is enough batch.  Harmless on 1-TC v5e/v6e.
    if pl.cdiv(B, TB) < 2 and B >= 16:
        TB = _round_up(pl.cdiv(B, 2), 8)

    # ---- VMEM budget (v7x has only 64 MiB physical / 32 MiB scoped default) --
    param_bytes = 0
    for w, b in params:
        param_bytes += int(w.size) * w_itemsize + int(b.size) * 4
    layer_widths = [S + A] + [int(w.shape[1]) for w, _ in params]
    max_width = max(layer_widths)
    # per-row VMEM: double-buffered inputs + output, ~2 live f32 intermediates.
    per_row_bytes = (2 * (S + A) + 2 * out_dim + 2 * max_width) * 4
    budget = 24 * (1 << 20) - 2 * param_bytes          # keep << 64 MiB on v7x
    if budget > per_row_bytes * 8:
        tb_cap = max(8, (budget // per_row_bytes) // 8 * 8)
        TB = min(TB, tb_cap)
    grid = (pl.cdiv(B, TB),)

    vmem_needed = 2 * param_bytes + TB * per_row_bytes
    vmem_limit = None
    if vmem_needed > 16 * (1 << 20):
        vmem_limit = int(min(_round_up(vmem_needed * 5 // 4, 1 << 20),
                             60 * (1 << 20)))

    # ---- inputs / specs ------------------------------------------------------
    # Activations stream over the batch grid; every weight/bias index_map
    # returns (0, 0) so the parameters stay VMEM-resident (DMA'd once).
    in_arrays = [states]
    in_specs = [pl.BlockSpec((TB, S), lambda i: (i, 0))]
    if has_actions:
        in_arrays.append(actions.astype(jnp.float32))
        in_specs.append(pl.BlockSpec((TB, A), lambda i: (i, 0)))

    def _add_param(arr):
        in_arrays.append(arr)
        in_specs.append(pl.BlockSpec(arr.shape, lambda i: (0, 0)))

    if has_actions:
        w1, b1 = params[0]
        w1 = w1.astype(compute_dtype)          # cast hoisted out of the kernel
        _add_param(w1[:S, :])                  # states part of layer 0
        _add_param(w1[S:, :])                  # actions part of layer 0
        _add_param(b1.astype(jnp.float32).reshape(1, -1))
        rest_params = params[1:]
    else:
        w1, b1 = params[0]
        _add_param(w1.astype(compute_dtype))
        _add_param(b1.astype(jnp.float32).reshape(1, -1))
        rest_params = params[1:]
    for (w, b) in rest_params:
        _add_param(w.astype(compute_dtype))
        _add_param(b.astype(jnp.float32).reshape(1, -1))

    cp_kwargs = dict(dimension_semantics=("parallel",))
    if vmem_limit is not None:
        cp_kwargs["vmem_limit_bytes"] = vmem_limit

    kernel = functools.partial(_mlp_kernel,
                               num_hidden_layers=num_layers - 1,
                               has_actions=has_actions)
    out = pl.pallas_call(
        kernel,
        out_shape=jax.ShapeDtypeStruct((B, out_dim), jnp.float32),
        grid=grid,
        in_specs=in_specs,
        out_specs=pl.BlockSpec((TB, out_dim), lambda i: (i, 0)),
        compiler_params=pltpu.CompilerParams(**cp_kwargs),
    )(*in_arrays)
    return out


def _mlp_ref(states, params, actions=None):
    x = states if actions is None else jnp.concatenate([states, actions], axis=-1)
    h = x.astype(jnp.float32)
    for w, b in params:
        h = jnp.maximum(h @ w.astype(jnp.float32) + b.reshape(1, -1), 0.0)
    return h


if __name__ == "__main__":
    # Small shapes consistent with the module: batch=8, state_dim=16,
    # action_dim=4, hidden_sizes=[32, 32].
    B, S, A, H = 8, 16, 4, 32

    key = jax.random.PRNGKey(0)
    ks = jax.random.split(key, 6)
    states = jax.random.normal(ks[0], (B, S), dtype=jnp.float32)
    actions = jax.random.normal(ks[1], (B, A), dtype=jnp.float32)

    # Layer 1 takes the concatenated (state, action) feature vector.
    w1 = jax.random.normal(ks[2], (S + A, H), dtype=jnp.float32) * 0.1
    b1 = jax.random.normal(ks[3], (1, H), dtype=jnp.float32) * 0.01
    w2 = jax.random.normal(ks[4], (H, H), dtype=jnp.float32) * 0.1
    b2 = jax.random.normal(ks[5], (1, H), dtype=jnp.float32) * 0.01
    params = [(w1, b1), (w2, b2)]

    # forward(states, actions) — split-first-layer path, f32 (exact vs torch).
    out = mlp_forward(states, params, actions)
    jax.block_until_ready(out)
    ref = _mlp_ref(states, params, actions)
    assert out.shape == (B, H) and out.dtype == jnp.float32
    assert bool(jnp.allclose(out, ref, atol=1e-5, rtol=1e-5))

    # forward(states) without actions — states-only MLP (layer 1 sized S only).
    w1_s = w1[:S, :]
    params_s = [(w1_s, b1), (w2, b2)]
    out_s = mlp_forward(states, params_s)
    jax.block_until_ready(out_s)
    ref_s = _mlp_ref(states, params_s)
    assert out_s.shape == (B, H)
    assert bool(jnp.allclose(out_s, ref_s, atol=1e-5, rtol=1e-5))

    # bf16-MXU path (weights cast once in the wrapper, f32 accumulation):
    # numerics differ slightly from the f32 reference, so loosen tolerance.
    out_bf16 = mlp_forward(states, params, actions, mxu_dtype=jnp.bfloat16)
    jax.block_until_ready(out_bf16)
    assert out_bf16.shape == (B, H)
    assert bool(jnp.allclose(out_bf16, ref, atol=2e-2, rtol=2e-2))

    print("KERNEL_OK")
</pallas_src>

<mosaic_0001>
module attributes {stable_mosaic.version = 11 : i64} {
  func.func @_mlp_kernel(%arg0: i32, %arg1: memref<8x16xf32, #tpu.memory_space<vmem>>, %arg2: memref<8x4xf32, #tpu.memory_space<vmem>>, %arg3: memref<16x32xf32, #tpu.memory_space<vmem>>, %arg4: memref<4x32xf32, #tpu.memory_space<vmem>>, %arg5: memref<1x32xf32, #tpu.memory_space<vmem>>, %arg6: memref<32x32xf32, #tpu.memory_space<vmem>>, %arg7: memref<1x32xf32, #tpu.memory_space<vmem>>, %arg8: memref<8x32xf32, #tpu.memory_space<vmem>>) attributes {dimension_semantics = [#tpu.dimension_semantics<parallel>], iteration_bounds = array<i64: 1>, scalar_prefetch = 0 : i64, scratch_operands = 0 : i64, tpu.core_type = #tpu.core_type<tc>, window_params = [{transform_indices = @transform_0, window_bounds = array<i64: 8, 16>}, {transform_indices = @transform_1, window_bounds = array<i64: 8, 4>}, {pipeline_mode = #tpu.pipeline_mode<synchronous>, transform_indices = @transform_2, window_bounds = array<i64: 16, 32>}, {pipeline_mode = #tpu.pipeline_mode<synchronous>, transform_indices = @transform_3, window_bounds = array<i64: 4, 32>}, {pipeline_mode = #tpu.pipeline_mode<synchronous>, transform_indices = @transform_4, window_bounds = array<i64: 1, 32>}, {pipeline_mode = #tpu.pipeline_mode<synchronous>, transform_indices = @transform_5, window_bounds = array<i64: 32, 32>}, {pipeline_mode = #tpu.pipeline_mode<synchronous>, transform_indices = @transform_6, window_bounds = array<i64: 1, 32>}, {transform_indices = @transform_7, window_bounds = array<i64: 8, 32>}]} {
    %c0 = arith.constant 0 : index
    %c0_0 = arith.constant 0 : index
    %0 = vector.load %arg1[%c0, %c0_0] : memref<8x16xf32, #tpu.memory_space<vmem>>, vector<8x16xf32>
    %c0_1 = arith.constant 0 : index
    %c0_2 = arith.constant 0 : index
    %1 = vector.load %arg3[%c0_1, %c0_2] : memref<16x32xf32, #tpu.memory_space<vmem>>, vector<16x32xf32>
    %cst = arith.constant dense<0.000000e+00> : vector<8x32xf32>
    %2 = tpu.matmul %0, %1, %cst {dimension_numbers = #tpu.dot_dimension_numbers<[1], [0], [0], [1], [0, 0, 1, 1], [], []>} : vector<8x16xf32>, vector<16x32xf32>, vector<8x32xf32> -> vector<8x32xf32>
    %c0_3 = arith.constant 0 : index
    %c0_4 = arith.constant 0 : index
    %3 = vector.load %arg2[%c0_3, %c0_4] : memref<8x4xf32, #tpu.memory_space<vmem>>, vector<8x4xf32>
    %c0_5 = arith.constant 0 : index
    %c0_6 = arith.constant 0 : index
    %4 = vector.load %arg4[%c0_5, %c0_6] : memref<4x32xf32, #tpu.memory_space<vmem>>, vector<4x32xf32>
    %cst_7 = arith.constant dense<0.000000e+00> : vector<8x32xf32>
    %5 = tpu.matmul %3, %4, %cst_7 {dimension_numbers = #tpu.dot_dimension_numbers<[1], [0], [0], [1], [0, 0, 1, 1], [], []>} : vector<8x4xf32>, vector<4x32xf32>, vector<8x32xf32> -> vector<8x32xf32>
    %6 = arith.addf %2, %5 : vector<8x32xf32>
    %c0_8 = arith.constant 0 : index
    %c0_9 = arith.constant 0 : index
    %7 = vector.load %arg5[%c0_8, %c0_9] : memref<1x32xf32, #tpu.memory_space<vmem>>, vector<1x32xf32>
    %8 = vector.broadcast %7 : vector<1x32xf32> to vector<8x32xf32>
    %9 = arith.addf %6, %8 : vector<8x32xf32>
    %cst_10 = arith.constant 0.000000e+00 : f32
    %10 = vector.broadcast %cst_10 : f32 to vector<8x32xf32>
    %11 = arith.maximumf %9, %10 : vector<8x32xf32>
    %c0_11 = arith.constant 0 : index
    %c0_12 = arith.constant 0 : index
    %12 = vector.load %arg6[%c0_11, %c0_12] : memref<32x32xf32, #tpu.memory_space<vmem>>, vector<32x32xf32>
    %cst_13 = arith.constant dense<0.000000e+00> : vector<8x32xf32>
    %13 = tpu.matmul %11, %12, %cst_13 {dimension_numbers = #tpu.dot_dimension_numbers<[1], [0], [0], [1], [0, 0, 1, 1], [], []>} : vector<8x32xf32>, vector<32x32xf32>, vector<8x32xf32> -> vector<8x32xf32>
    %c0_14 = arith.constant 0 : index
    %c0_15 = arith.constant 0 : index
    %14 = vector.load %arg7[%c0_14, %c0_15] : memref<1x32xf32, #tpu.memory_space<vmem>>, vector<1x32xf32>
    %15 = vector.broadcast %14 : vector<1x32xf32> to vector<8x32xf32>
    %16 = arith.addf %13, %15 : vector<8x32xf32>
    %cst_16 = arith.constant 0.000000e+00 : f32
    %17 = vector.broadcast %cst_16 : f32 to vector<8x32xf32>
    %18 = arith.maximumf %16, %17 : vector<8x32xf32>
    %c0_17 = arith.constant 0 : index
    %c0_18 = arith.constant 0 : index
    %19 = vector.load %arg8[%c0_17, %c0_18] : memref<8x32xf32, #tpu.memory_space<vmem>>, vector<8x32xf32>
    tpu.vector_store %arg8[%c0_17, %c0_18], %18 {strides = array<i32>} : memref<8x32xf32, #tpu.memory_space<vmem>>, vector<8x32xf32>,
    return
  }
  func.func @transform_0(%arg0: i32) -> (i32, i32) {
    %c0_i32 = arith.constant 0 : i32
    %c0_i32_0 = arith.constant 0 : i32
    return %arg0, %c0_i32 : i32, i32
  }
  func.func @transform_1(%arg0: i32) -> (i32, i32) {
    %c0_i32 = arith.constant 0 : i32
    %c0_i32_0 = arith.constant 0 : i32
    return %arg0, %c0_i32 : i32, i32
  }
  func.func @transform_2(%arg0: i32) -> (i32, i32) {
    %c0_i32 = arith.constant 0 : i32
    %c0_i32_0 = arith.constant 0 : i32
    %c0_i32_1 = arith.constant 0 : i32
    return %c0_i32, %c0_i32_0 : i32, i32
  }
  func.func @transform_3(%arg0: i32) -> (i32, i32) {
    %c0_i32 = arith.constant 0 : i32
    %c0_i32_0 = arith.constant 0 : i32
    %c0_i32_1 = arith.constant 0 : i32
    return %c0_i32, %c0_i32_0 : i32, i32
  }
  func.func @transform_4(%arg0: i32) -> (i32, i32) {
    %c0_i32 = arith.constant 0 : i32
    %c0_i32_0 = arith.constant 0 : i32
    %c0_i32_1 = arith.constant 0 : i32
    return %c0_i32, %c0_i32_0 : i32, i32
  }
  func.func @transform_5(%arg0: i32) -> (i32, i32) {
    %c0_i32 = arith.constant 0 : i32
    %c0_i32_0 = arith.constant 0 : i32
    %c0_i32_1 = arith.constant 0 : i32
    return %c0_i32, %c0_i32_0 : i32, i32
  }
  func.func @transform_6(%arg0: i32) -> (i32, i32) {
    %c0_i32 = arith.constant 0 : i32
    %c0_i32_0 = arith.constant 0 : i32
    %c0_i32_1 = arith.constant 0 : i32
    return %c0_i32, %c0_i32_0 : i32, i32
  }
  func.func @transform_7(%arg0: i32) -> (i32, i32) {
    %c0_i32 = arith.constant 0 : i32
    %c0_i32_0 = arith.constant 0 : i32
    return %arg0, %c0_i32 : i32, i32
  }
}

</mosaic_0001>

<llo_original>
// kernel: tpu_custom_call.1
$region0: #{tpu_custom_call.1}
  #allocation0 [shape = 'u32[]', space=smem, size = 0x4, offset = 0x4, fixed_abs, tag = 'smem constant byte address 0x4 - core index']
  #allocation1 [shape = 'u32[144,128]{1,0:T(1,128)}', space=vmem, size = 0x12000, scoped, tag = 'internal scratch']
  %s0 = inlined_call_operand.hbm [shape: f32[8,16], index: 0, kind: input, shape index: {}]
  %s1 = inlined_call_operand.vmem [shape: f32[8,4], index: 1, kind: input, shape index: {}]
  %s2 = inlined_call_operand.vmem [shape: f32[16,32], index: 2, kind: input, shape index: {}]
  %s3 = inlined_call_operand.vmem [shape: f32[4,32], index: 3, kind: input, shape index: {}]
  %s4 = inlined_call_operand.vmem [shape: f32[1,32], index: 4, kind: input, shape index: {}]
  %s5 = inlined_call_operand.hbm [shape: f32[32,32], index: 5, kind: input, shape index: {}]
  %s6 = inlined_call_operand.vmem [shape: f32[1,32], index: 6, kind: input, shape index: {}]
  %s7 = inlined_call_operand.hbm [shape: f32[8,32], index: 7, kind: output, shape index: {}]
  %s8 = sld [smem:[#allocation0]]
  $region46: #{tpu_custom_call.1} parent=0
    _
  %s10 = ssub.s32 1, %s8
  %s11 = scalar_select 0, %s10, %s8
  $region1: #{tpu_custom_call.1} parent=0
    #allocation2 [shape = 'u8[4096]{0}', space=vmem, size = 0x1000, scoped, tag = 'input window, operand 0, single buffered']
    #allocation3 [shape = 's32[1]{0}', space=sflag, size = 0x4, scoped, tag = 'scoped memory for tpu_custom_call.1']
    #allocation4 [shape = 's32[1]{0}', space=sflag, size = 0x4, scoped, tag = 'scoped memory for tpu_custom_call.1']
    #allocation5 [shape = 'u8[16384]{0}', space=vmem, size = 0x4000, scoped, tag = 'input window, operand 5, single buffered']
    #allocation6 [shape = 's32[1]{0}', space=sflag, size = 0x4, scoped, tag = 'scoped memory for tpu_custom_call.1']
    #allocation7 [shape = 'u8[4096]{0}', space=vmem, size = 0x1000, scoped, tag = 'output window, operand 0, single buffered']
    %12 = vsyncpa [#allocation3], 0
    %13 = vsyncpa [#allocation6], 0
    %14 = vsyncpa [#allocation4], 0
    // Predicated region
    $region2: #{tpu_custom_call.1} parent=1 // pred_check
      _
    $region3: #{tpu_custom_call.1} parent=1 // pred_check_branch
      %16 = sbr.rel (0) target = $region5
    $region4: #{tpu_custom_call.1} parent=1 // pred_region
      %s18 = ssub.s32 128, 128
      %19 = vsyncadd [#allocation3], %s18
      %s21 = sshll.u32 [#allocation2], 4
      %s22 = int_to_ptr.vmem [resolvable:$true] %s21
      %24 = dma.hbm_to_vmem [thread:$0]  %s0, 128, %s22, [#allocation3]
    $region5: #{tpu_custom_call.1} parent=1 // pred_fallthru
      _
    // Predicated region
    $region6: #{tpu_custom_call.1} parent=1 // pred_check
      _
    $region7: #{tpu_custom_call.1} parent=1 // pred_check_branch
      %26 = sbr.rel (0) target = $region9
    $region8: #{tpu_custom_call.1} parent=1 // pred_region
      _
    $region9: #{tpu_custom_call.1} parent=1 // pred_fallthru
      _
    // Predicated region
    $region10: #{tpu_custom_call.1} parent=1 // pred_check
      _
    $region11: #{tpu_custom_call.1} parent=1 // pred_check_branch
      %28 = sbr.rel (0) target = $region13
    $region12: #{tpu_custom_call.1} parent=1 // pred_region
      _
    $region13: #{tpu_custom_call.1} parent=1 // pred_fallthru
      _
    // Predicated region
    $region14: #{tpu_custom_call.1} parent=1 // pred_check
      _
    $region15: #{tpu_custom_call.1} parent=1 // pred_check_branch
      %30 = sbr.rel (0) target = $region17
    $region16: #{tpu_custom_call.1} parent=1 // pred_region
      _
    $region17: #{tpu_custom_call.1} parent=1 // pred_fallthru
      _
    // Predicated region
    $region18: #{tpu_custom_call.1} parent=1 // pred_check
      _
    $region19: #{tpu_custom_call.1} parent=1 // pred_check_branch
      %32 = sbr.rel (0) target = $region21
    $region20: #{tpu_custom_call.1} parent=1 // pred_region
      _
    $region21: #{tpu_custom_call.1} parent=1 // pred_fallthru
      _
    // Predicated region
    $region22: #{tpu_custom_call.1} parent=1 // pred_check
      _
    $region23: #{tpu_custom_call.1} parent=1 // pred_check_branch
      %34 = sbr.rel (0) target = $region25
    $region24: #{tpu_custom_call.1} parent=1 // pred_region
      %s36 = ssub.s32 512, 512
      %37 = vsyncadd [#allocation6], %s36
      %s38 = sshll.u32 [#allocation5], 4
      %s39 = int_to_ptr.vmem [resolvable:$true] %s38
      %44 = dma.hbm_to_vmem [thread:$0]  %s5, 512, %s39, [#allocation6], 128, 128, 8
    $region25: #{tpu_custom_call.1} parent=1 // pred_fallthru
      _
    // Predicated region
    $region26: #{tpu_custom_call.1} parent=1 // pred_check
      _
    $region27: #{tpu_custom_call.1} parent=1 // pred_check_branch
      %46 = sbr.rel (0) target = $region29
    $region28: #{tpu_custom_call.1} parent=1 // pred_region
      _
    $region29: #{tpu_custom_call.1} parent=1 // pred_fallthru
      _
    // Predicated region
    $region30: #{tpu_custom_call.1} parent=1 // pred_check
      _
    $region31: #{tpu_custom_call.1} parent=1 // pred_check_branch
      %48 = sbr.rel (0) target = $region33
    $region32: #{tpu_custom_call.1} parent=1 // pred_region
      %49 = dma.done [#allocation3], 128
    $region33: #{tpu_custom_call.1} parent=1 // pred_fallthru
      _
    // Predicated region
    $region34: #{tpu_custom_call.1} parent=1 // pred_check
      _
    $region35: #{tpu_custom_call.1} parent=1 // pred_check_branch
      %51 = sbr.rel (0) target = $region37
    $region36: #{tpu_custom_call.1} parent=1 // pred_region
      %52 = dma.done [#allocation6], 512
    $region37: #{tpu_custom_call.1} parent=1 // pred_fallthru
      _
    %v53 = vld [vmem:[#allocation2] sm:$0xff]
    %v54 = vld [vmem:[%s2] sm:$0xff]
    %v55 = vld [vmem:[%s2 + $0x8] sm:$0xff]
    %v56 = vld [vmem:[%s1] sm:$0xff]
    %v57 = vld [vmem:[%s3] sm:$0xf]
    %vm58 = vcmask 31744
    %v60 = vsel %vm58, %v56, 0
    %vm62 = vcmask 1043456
    %v64 = vsel %vm62, %v57, 0
    %66 = vmatprep.subr.mxu0 0.0
    %67 = vmatpush1.msra.mxu0 %v64
    %68 = vmatprep.subr.mxu0 0.0
    %69 = vmatpush1.msra.mxu0 0.0
    %70 = vmatprep.subr.mxu0 0.0
    %71 = vmatpush1.msra.mxu0 0.0
    %72 = vmatprep.subr.mxu0 0.0
    %73 = vmatpush1.msra.mxu0 0.0
    %74 = vmatprep.subr.mxu0 0.0
    %75 = vmatpush1.msra.mxu0 0.0
    %76 = vmatprep.subr.mxu0 0.0
    %77 = vmatpush1.msra.mxu0 0.0
    %78 = vmatprep.subr.mxu0 0.0
    %79 = vmatpush1.msra.mxu0 0.0
    %80 = vmatprep.subr.mxu0 0.0
    %81 = vmatpush1.msra.mxu0 0.0
    %82 = vmatprep.subr.mxu0 0.0
    %83 = vmatpush1.msra.mxu0 0.0
    %84 = vmatprep.subr.mxu0 0.0
    %85 = vmatpush1.msra.mxu0 0.0
    %86 = vmatprep.subr.mxu0 0.0
    %87 = vmatpush1.msra.mxu0 0.0
    %88 = vmatprep.subr.mxu0 0.0
    %89 = vmatpush1.msra.mxu0 0.0
    %90 = vmatprep.subr.mxu0 0.0
    %91 = vmatpush1.msra.mxu0 0.0
    %92 = vmatprep.subr.mxu0 0.0
    %93 = vmatpush1.msra.mxu0 0.0
    %94 = vmatprep.subr.mxu0 0.0
    %95 = vmatpush1.msra.mxu0 0.0
    %96 = vmatprep.subr.mxu0 0.0
    %97 = vmatpush1.msra.mxu0 0.0
    %98 = vmatprep.subr.mxu0 0.0
    %99 = vmatpush1.msra.mxu0 0.0
    %100 = vmatprep.subr.mxu0 0.0
    %101 = vmatpush1.msra.mxu0 0.0
    %102 = vmatprep.subr.mxu0 0.0
    %103 = vmatpush1.msra.mxu0 0.0
    %104 = vmatprep.subr.mxu0 0.0
    %105 = vmatpush1.msra.mxu0 0.0
    %106 = vmatprep.subr.mxu0 0.0
    %107 = vmatpush1.msra.mxu0 0.0
    %108 = vmatprep.subr.mxu0 0.0
    %109 = vmatpush1.msra.mxu0 0.0
    %110 = vmatprep.subr.mxu0 0.0
    %111 = vmatpush1.msra.mxu0 0.0
    %112 = vmatprep.subr.mxu0 0.0
    %113 = vmatpush1.msra.mxu0 0.0
    %114 = vmatprep.subr.mxu0 0.0
    %115 = vmatpush1.msra.mxu0 0.0
    %116 = vmatprep.subr.mxu0 0.0
    %117 = vmatpush1.msra.mxu0 0.0
    %118 = vmatprep.subr.mxu0 0.0
    %119 = vmatpush1.msra.mxu0 0.0
    %120 = vmatprep.subr.mxu0 0.0
    %121 = vmatpush1.msra.mxu0 0.0
    %122 = vmatprep.subr.mxu0 0.0
    %123 = vmatpush1.msra.mxu0 0.0
    %124 = vmatprep.subr.mxu0 0.0
    %125 = vmatpush1.msra.mxu0 0.0
    %126 = vmatprep.subr.mxu0 0.0
    %127 = vmatpush1.msra.mxu0 0.0
    %128 = vmatprep.subr.mxu0 0.0
    %129 = vmatpush1.msra.mxu0 0.0
    %130 = vmatprep.mubr.f32.mxu0 0.0
    %131 = vmatmul.mubr.f32.gmra.mrb[0].mxu0 %v60
    %v132 = vpop.f32.mrb[0].mxu0
    %v133 = vadd.f32 0.0, %v132
    %v134 = vpop.f32.mrb[0].mxu0
    %135 = vdwg.mxu0
    %vm136 = vcmask 130048
    %v138 = vsel %vm136, %v53, 0
    %140 = vmatprep.subr.mxu0 0.0
    %141 = vmatpush1.msra.mxu0 %v54
    %142 = vmatprep.subr.mxu0 0.0
    %143 = vmatpush1.msra.mxu0 %v55
    %144 = vmatprep.subr.mxu0 0.0
    %145 = vmatpush1.msra.mxu0 0.0
    %146 = vmatprep.subr.mxu0 0.0
    %147 = vmatpush1.msra.mxu0 0.0
    %148 = vmatprep.subr.mxu0 0.0
    %149 = vmatpush1.msra.mxu0 0.0
    %150 = vmatprep.subr.mxu0 0.0
    %151 = vmatpush1.msra.mxu0 0.0
    %152 = vmatprep.subr.mxu0 0.0
    %153 = vmatpush1.msra.mxu0 0.0
    %154 = vmatprep.subr.mxu0 0.0
    %155 = vmatpush1.msra.mxu0 0.0
    %156 = vmatprep.subr.mxu0 0.0
    %157 = vmatpush1.msra.mxu0 0.0
    %158 = vmatprep.subr.mxu0 0.0
    %159 = vmatpush1.msra.mxu0 0.0
    %160 = vmatprep.subr.mxu0 0.0
    %161 = vmatpush1.msra.mxu0 0.0
    %162 = vmatprep.subr.mxu0 0.0
    %163 = vmatpush1.msra.mxu0 0.0
    %164 = vmatprep.subr.mxu0 0.0
    %165 = vmatpush1.msra.mxu0 0.0
    %166 = vmatprep.subr.mxu0 0.0
    %167 = vmatpush1.msra.mxu0 0.0
    %168 = vmatprep.subr.mxu0 0.0
    %169 = vmatpush1.msra.mxu0 0.0
    %170 = vmatprep.subr.mxu0 0.0
    %171 = vmatpush1.msra.mxu0 0.0
    %172 = vmatprep.subr.mxu0 0.0
    %173 = vmatpush1.msra.mxu0 0.0
    %174 = vmatprep.subr.mxu0 0.0
    %175 = vmatpush1.msra.mxu0 0.0
    %176 = vmatprep.subr.mxu0 0.0
    %177 = vmatpush1.msra.mxu0 0.0
    %178 = vmatprep.subr.mxu0 0.0
    %179 = vmatpush1.msra.mxu0 0.0
    %180 = vmatprep.subr.mxu0 0.0
    %181 = vmatpush1.msra.mxu0 0.0
    %182 = vmatprep.subr.mxu0 0.0
    %183 = vmatpush1.msra.mxu0 0.0
    %184 = vmatprep.subr.mxu0 0.0
    %185 = vmatpush1.msra.mxu0 0.0
    %186 = vmatprep.subr.mxu0 0.0
    %187 = vmatpush1.msra.mxu0 0.0
    %188 = vmatprep.subr.mxu0 0.0
    %189 = vmatpush1.msra.mxu0 0.0
    %190 = vmatprep.subr.mxu0 0.0
    %191 = vmatpush1.msra.mxu0 0.0
    %192 = vmatprep.subr.mxu0 0.0
    %193 = vmatpush1.msra.mxu0 0.0
    %194 = vmatprep.subr.mxu0 0.0
    %195 = vmatpush1.msra.mxu0 0.0
    %196 = vmatprep.subr.mxu0 0.0
    %197 = vmatpush1.msra.mxu0 0.0
    %198 = vmatprep.subr.mxu0 0.0
    %199 = vmatpush1.msra.mxu0 0.0
    %200 = vmatprep.subr.mxu0 0.0
    %201 = vmatpush1.msra.mxu0 0.0
    %202 = vmatprep.subr.mxu0 0.0
    %203 = vmatpush1.msra.mxu0 0.0
    %204 = vmatprep.mubr.f32.mxu0 0.0
    %205 = vmatmul.mubr.f32.gmra.mrb[0].mxu0 %v138
    %v206 = vpop.f32.mrb[0].mxu0
    %v207 = vadd.f32 %v133, %v206
    %v208 = vpop.f32.mrb[0].mxu0
    %209 = vdwg.mxu0
    %v210 = vld [vmem:[%s4] sm:$0x1]
    %v212 = vlaneseq
    %v213 = vshrl.u32 %v212, 7
    %v214 = vsub.s32 0, %v213
    %v215 = vrot.slane %v210, %v214
    %v217 = vadd.f32 %v207, %v215
    %v218 = vmax.f32 %v217, 0.0
    %v219 = vld [vmem:[#allocation5] sm:$0xff]
    %v220 = vld [vmem:[#allocation5 + $0x8] sm:$0xff]
    %v221 = vld [vmem:[#allocation5 + $0x10] sm:$0xff]
    %v222 = vld [vmem:[#allocation5 + $0x18] sm:$0xff]
    %v223 = vld [vmem:[%s6] sm:$0x1]
    %v225 = vlaneseq
    %v226 = vshrl.u32 %v225, 7
    %v227 = vsub.s32 0, %v226
    %v228 = vrot.slane %v223, %v227
    %vm230 = vcmask 261120
    %v232 = vsel %vm230, %v218, 0
    %234 = vmatprep.subr.mxu0 0.0
    %235 = vmatpush1.msra.mxu0 %v219
    %236 = vmatprep.subr.mxu0 0.0
    %237 = vmatpush1.msra.mxu0 %v220
    %238 = vmatprep.subr.mxu0 0.0
    %239 = vmatpush1.msra.mxu0 %v221
    %240 = vmatprep.subr.mxu0 0.0
    %241 = vmatpush1.msra.mxu0 %v222
    %242 = vmatprep.subr.mxu0 0.0
    %243 = vmatpush1.msra.mxu0 0.0
    %244 = vmatprep.subr.mxu0 0.0
    %245 = vmatpush1.msra.mxu0 0.0
    %246 = vmatprep.subr.mxu0 0.0
    %247 = vmatpush1.msra.mxu0 0.0
    %248 = vmatprep.subr.mxu0 0.0
    %249 = vmatpush1.msra.mxu0 0.0
    %250 = vmatprep.subr.mxu0 0.0
    %251 = vmatpush1.msra.mxu0 0.0
    %252 = vmatprep.subr.mxu0 0.0
    %253 = vmatpush1.msra.mxu0 0.0
    %254 = vmatprep.subr.mxu0 0.0
    %255 = vmatpush1.msra.mxu0 0.0
    %256 = vmatprep.subr.mxu0 0.0
    %257 = vmatpush1.msra.mxu0 0.0
    %258 = vmatprep.subr.mxu0 0.0
    %259 = vmatpush1.msra.mxu0 0.0
    %260 = vmatprep.subr.mxu0 0.0
    %261 = vmatpush1.msra.mxu0 0.0
    %262 = vmatprep.subr.mxu0 0.0
    %263 = vmatpush1.msra.mxu0 0.0
    %264 = vmatprep.subr.mxu0 0.0
    %265 = vmatpush1.msra.mxu0 0.0
    %266 = vmatprep.subr.mxu0 0.0
    %267 = vmatpush1.msra.mxu0 0.0
    %268 = vmatprep.subr.mxu0 0.0
    %269 = vmatpush1.msra.mxu0 0.0
    %270 = vmatprep.subr.mxu0 0.0
    %271 = vmatpush1.msra.mxu0 0.0
    %272 = vmatprep.subr.mxu0 0.0
    %273 = vmatpush1.msra.mxu0 0.0
    %274 = vmatprep.subr.mxu0 0.0
    %275 = vmatpush1.msra.mxu0 0.0
    %276 = vmatprep.subr.mxu0 0.0
    %277 = vmatpush1.msra.mxu0 0.0
    %278 = vmatprep.subr.mxu0 0.0
    %279 = vmatpush1.msra.mxu0 0.0
    %280 = vmatprep.subr.mxu0 0.0
    %281 = vmatpush1.msra.mxu0 0.0
    %282 = vmatprep.subr.mxu0 0.0
    %283 = vmatpush1.msra.mxu0 0.0
    %284 = vmatprep.subr.mxu0 0.0
    %285 = vmatpush1.msra.mxu0 0.0
    %286 = vmatprep.subr.mxu0 0.0
    %287 = vmatpush1.msra.mxu0 0.0
    %288 = vmatprep.subr.mxu0 0.0
    %289 = vmatpush1.msra.mxu0 0.0
    %290 = vmatprep.subr.mxu0 0.0
    %291 = vmatpush1.msra.mxu0 0.0
    %292 = vmatprep.subr.mxu0 0.0
    %293 = vmatpush1.msra.mxu0 0.0
    %294 = vmatprep.subr.mxu0 0.0
    %295 = vmatpush1.msra.mxu0 0.0
    %296 = vmatprep.subr.mxu0 0.0
    %297 = vmatpush1.msra.mxu0 0.0
    %298 = vmatprep.mubr.f32.mxu0 0.0
    %299 = vmatmul.mubr.f32.gmra.mrb[0].mxu0 %v232
    %v300 = vpop.f32.mrb[0].mxu0
    %v301 = vadd.f32 %v228, %v300
    %v302 = vpop.f32.mrb[0].mxu0
    %303 = vdwg.mxu0
    %v304 = vmax.f32 %v301, 0.0
    %305 = vst.msk [vmem:[#allocation7] sm:$0xff] %vm230, %v304
    // Predicated region
    $region38: #{tpu_custom_call.1} parent=1 // pred_check
      _
    $region39: #{tpu_custom_call.1} parent=1 // pred_check_branch
      %307 = sbr.rel (0) target = $region41
    $region40: #{tpu_custom_call.1} parent=1 // pred_region
      %s309 = ssub.s32 128, 128
      %310 = vsyncadd [#allocation4], %s309
      %s312 = sshll.u32 [#allocation7], 4
      %s313 = int_to_ptr.vmem [resolvable:$true] %s312
      %315 = dma.vmem_to_hbm [thread:$0]  %s313, 128, %s7, [#allocation4]
    $region41: #{tpu_custom_call.1} parent=1 // pred_fallthru
      _
    // Predicated region
    $region42: #{tpu_custom_call.1} parent=1 // pred_check
      _
    $region43: #{tpu_custom_call.1} parent=1 // pred_check_branch
      %317 = sbr.rel (0) target = $region45
    $region44: #{tpu_custom_call.1} parent=1 // pred_region
      %318 = dma.done [#allocation4], 128
    $region45: #{tpu_custom_call.1} parent=1 // pred_fallthru
      _
    %319 = vsyncpa [#allocation3], 1
    %320 = vsyncpa [#allocation6], 1
    %321 = vsyncpa [#allocation4], 1

</llo_original>
